<compile_context>
chip_gen: v7x
topology: tpu7x:2x2x1
jax: 0.10.0
libtpu: 0.0.40
codegen_flags: <defaults>
</compile_context>

<pallas_src>
import jax
import jax.numpy as jnp
from jax.experimental import pallas as pl
from jax.experimental.pallas import tpu as pltpu


def _round_up(x, m):
    return (x + m - 1) // m * m


def _vmem_budget():
    """Generation-aware (working-set budget, scoped-VMEM cap, default max tile)."""
    try:
        cap = pltpu.get_tpu_info().vmem_capacity_bytes
    except Exception:
        cap = 64 << 20  # conservative fallback (v7x-sized VMEM)
    if cap >= (128 << 20):          # v5e / v6e: 128 MiB VMEM
        return (96 << 20), (100 << 20), 2048
    return (40 << 20), (48 << 20), 512   # v7x: 64 MiB VMEM per TensorCore


def _mlp_feature_kernel(x_ref, w1_ref, b1_ref, w2_ref, b2_ref, h1_ref, h2_ref):
    # fc1: Linear(D_in -> H).  The forward hook captures the pre-activation output.
    x = x_ref[...].astype(jnp.bfloat16)                  # in-kernel cast (no HBM copy)
    w1 = w1_ref[...].astype(jnp.bfloat16)
    h1 = jnp.dot(x, w1, preferred_element_type=jnp.float32)   # f32 MXU accumulation
    h1 = h1 + b1_ref[...]
    h1_ref[...] = h1.astype(h1_ref.dtype)                # bf16 true-width store
    # ReLU (separate nn.Module, not hooked) computed from the f32 accumulator.
    a = jnp.maximum(h1, 0.0).astype(jnp.bfloat16)        # bf16 for the MXU
    # fc2: Linear(H -> D_out).  Hooked output.
    w2 = w2_ref[...].astype(jnp.bfloat16)
    h2 = jnp.dot(a, w2, preferred_element_type=jnp.float32)
    h2 = h2 + b2_ref[...]
    h2_ref[...] = h2.astype(h2_ref.dtype)                # bf16 true-width store


def feature_extractor_forward(x, params, *, max_tile_b=None,
                              feature_dtype=jnp.bfloat16):
    """Equivalent of FeatureExtractor(model, layers=["fc1", "fc2"])(x).

    model = Linear(D_in, H) -> ReLU -> Linear(H, D_out).  Returns the dict the
    PyTorch forward hooks would have populated (features in `feature_dtype`).
    """
    w1, b1, w2, b2 = params["w1"], params["b1"], params["w2"], params["b2"]
    b1 = jnp.reshape(b1, (1, -1)).astype(jnp.float32)
    b2 = jnp.reshape(b2, (1, -1)).astype(jnp.float32)

    B, D_in = x.shape
    H = w1.shape[1]
    D_out = w2.shape[1]

    budget, limit_cap, gen_max_tile = _vmem_budget()
    if max_tile_b is None:
        max_tile_b = gen_max_tile

    # VMEM working set: BlockSpec double-buffers every operand (including the
    # constant-index weights), plus slack for the in-kernel f32 accumulators.
    # TODO(synk): single-buffer the constant-index weights (pl.Buffered(1) /
    # manual DMA-to-scratch) to free VMEM on v7x for realistically large MLPs.
    def vmem_bytes(tb):
        tiles = tb * (4 * D_in + 2 * H + 2 * D_out)       # x (f32) + bf16 outputs
        weights = 4 * (D_in * H + H * D_out + H + D_out)  # f32 weights + biases
        return 2 * (tiles + weights) + 4 * tb * (H + D_out)

    # Batch tile: large enough to amortize the ~0.35 us/step overhead, small
    # enough to fit the generation's VMEM budget, always a multiple of 8.
    tile_b = min(_round_up(B, 8), max(int(max_tile_b), 8))
    if B > 8:
        # Keep >= 2 grid steps so ("parallel",) can feed both v7x TensorCores.
        tile_b = min(tile_b, _round_up(pl.cdiv(B, 2), 8))
    tile_b = max(8, _round_up(tile_b, 8))
    while tile_b > 8 and vmem_bytes(tile_b) > budget:
        tile_b = max(8, _round_up(tile_b // 2, 8))        # stays a multiple of 8

    # Pad the batch only to a sublane multiple of 8 (and only if needed); the
    # cdiv grid's last partial tile is handled by Pallas, so there is no
    # pad-to-tile-multiple cliff.  Extra rows are sliced off at the end.
    b_p = _round_up(B, 8)
    if b_p != B:
        x = jnp.pad(x, ((0, b_p - B), (0, 0)))
    grid = (pl.cdiv(b_p, tile_b),)

    cost = pl.CostEstimate(
        flops=2 * b_p * (D_in * H + H * D_out),
        transcendentals=0,
        bytes_accessed=(
            b_p * D_in * x.dtype.itemsize                 # x read
            + 4 * (D_in * H + H)                          # w1 + b1
            + 4 * (H * D_out + D_out)                     # w2 + b2
            + b_p * H * 2                                 # h1 (bf16 out)
            + b_p * D_out * 2                             # h2 (bf16 out)
        ),
    )

    vmem_limit = int(min(max(int(1.5 * vmem_bytes(tile_b)), 16 << 20), limit_cap))

    h1, h2 = pl.pallas_call(
        _mlp_feature_kernel,
        out_shape=(
            jax.ShapeDtypeStruct((b_p, H), feature_dtype),
            jax.ShapeDtypeStruct((b_p, D_out), feature_dtype),
        ),
        grid=grid,
        in_specs=[
            pl.BlockSpec((tile_b, D_in), lambda i: (i, 0)),   # x: batch-tiled, unpadded lanes
            pl.BlockSpec((D_in, H), lambda i: (0, 0)),        # w1: VMEM-resident
            pl.BlockSpec((1, H), lambda i: (0, 0)),           # b1: VMEM-resident
            pl.BlockSpec((H, D_out), lambda i: (0, 0)),       # w2: VMEM-resident
            pl.BlockSpec((1, D_out), lambda i: (0, 0)),       # b2: VMEM-resident
        ],
        out_specs=(
            pl.BlockSpec((tile_b, H), lambda i: (i, 0)),
            pl.BlockSpec((tile_b, D_out), lambda i: (i, 0)),
        ),
        compiler_params=pltpu.CompilerParams(
            dimension_semantics=("parallel",),   # batch axis -> both TCs on v7x
            vmem_limit_bytes=vmem_limit,
        ),
        cost_estimate=cost,
    )(x, w1, b1, w2, b2)

    # The dict the forward hooks would have populated (un-padded views).
    # TODO(synk): generic named-module hook registration has no Pallas analogue;
    # the extracted layers are fixed to {"fc1", "fc2"} of this MLP.
    return {"fc1": h1[:B], "fc2": h2[:B]}


def init_params(key, d_in, hidden, d_out):
    k1, k2, k3, k4 = jax.random.split(key, 4)
    # Deterministic synthetic init (analogue of nn.Linear's default init).
    w1 = jax.random.normal(k1, (d_in, hidden), jnp.float32) * (1.0 / jnp.sqrt(d_in))
    b1 = jax.random.normal(k2, (1, hidden), jnp.float32) * 0.01
    w2 = jax.random.normal(k3, (hidden, d_out), jnp.float32) * (1.0 / jnp.sqrt(hidden))
    b2 = jax.random.normal(k4, (1, d_out), jnp.float32) * 0.01
    return {"w1": w1, "b1": b1, "w2": w2, "b2": b2}


if __name__ == "__main__":
    key = jax.random.PRNGKey(0)
    kx, kp = jax.random.split(key)

    B, D_in, H, D_out = 8, 32, 64, 16
    x = jax.random.normal(kx, (B, D_in), jnp.float32)
    params = init_params(kp, D_in, H, D_out)

    feats = jax.jit(feature_extractor_forward)(x, params)
    feats = jax.block_until_ready(feats)

    # Cross-check against a plain-JAX f32 reference of the same forward.
    ref_h1 = x @ params["w1"] + params["b1"]
    ref_h2 = jnp.maximum(ref_h1, 0.0) @ params["w2"] + params["b2"]

    assert feats["fc1"].shape == (B, H) and feats["fc2"].shape == (B, D_out)
    # bf16 MXU operands / bf16 feature storage with f32 accumulation ->
    # tolerance loosened vs the f32 reference.
    assert jnp.allclose(feats["fc1"].astype(jnp.float32), ref_h1, atol=5e-2, rtol=5e-2)
    assert jnp.allclose(feats["fc2"].astype(jnp.float32), ref_h2, atol=5e-2, rtol=5e-2)

    print("KERNEL_OK")
</pallas_src>

<mosaic_0001>
module attributes {stable_mosaic.version = 11 : i64} {
  func.func @_mlp_feature_kernel(%arg0: i32, %arg1: memref<8x32xf32, #tpu.memory_space<vmem>>, %arg2: memref<32x64xf32, #tpu.memory_space<vmem>>, %arg3: memref<1x64xf32, #tpu.memory_space<vmem>>, %arg4: memref<64x16xf32, #tpu.memory_space<vmem>>, %arg5: memref<1x16xf32, #tpu.memory_space<vmem>>, %arg6: memref<8x64xbf16, #tpu.memory_space<vmem>>, %arg7: memref<8x16xbf16, #tpu.memory_space<vmem>>) attributes {dimension_semantics = [#tpu.dimension_semantics<parallel>], iteration_bounds = array<i64: 1>, scalar_prefetch = 0 : i64, scratch_operands = 0 : i64, tpu.core_type = #tpu.core_type<tc>, window_params = [{transform_indices = @transform_0, window_bounds = array<i64: 8, 32>}, {pipeline_mode = #tpu.pipeline_mode<synchronous>, transform_indices = @transform_1, window_bounds = array<i64: 32, 64>}, {pipeline_mode = #tpu.pipeline_mode<synchronous>, transform_indices = @transform_2, window_bounds = array<i64: 1, 64>}, {pipeline_mode = #tpu.pipeline_mode<synchronous>, transform_indices = @transform_3, window_bounds = array<i64: 64, 16>}, {pipeline_mode = #tpu.pipeline_mode<synchronous>, transform_indices = @transform_4, window_bounds = array<i64: 1, 16>}, {transform_indices = @transform_5, window_bounds = array<i64: 8, 64>}, {transform_indices = @transform_6, window_bounds = array<i64: 8, 16>}]} {
    %c0 = arith.constant 0 : index
    %c0_0 = arith.constant 0 : index
    %0 = vector.load %arg1[%c0, %c0_0] : memref<8x32xf32, #tpu.memory_space<vmem>>, vector<8x32xf32>
    %1 = arith.truncf %0 : vector<8x32xf32> to vector<8x32xbf16>
    %c0_1 = arith.constant 0 : index
    %c0_2 = arith.constant 0 : index
    %2 = vector.load %arg2[%c0_1, %c0_2] : memref<32x64xf32, #tpu.memory_space<vmem>>, vector<32x64xf32>
    %3 = arith.truncf %2 : vector<32x64xf32> to vector<32x64xbf16>
    %cst = arith.constant dense<0.000000e+00> : vector<8x64xf32>
    %4 = tpu.matmul %1, %3, %cst {dimension_numbers = #tpu.dot_dimension_numbers<[1], [0], [0], [1], [0, 0, 1, 1], [], []>} : vector<8x32xbf16>, vector<32x64xbf16>, vector<8x64xf32> -> vector<8x64xf32>
    %c0_3 = arith.constant 0 : index
    %c0_4 = arith.constant 0 : index
    %5 = vector.load %arg3[%c0_3, %c0_4] : memref<1x64xf32, #tpu.memory_space<vmem>>, vector<1x64xf32>
    %6 = vector.broadcast %5 : vector<1x64xf32> to vector<8x64xf32>
    %7 = arith.addf %4, %6 : vector<8x64xf32>
    %8 = arith.truncf %7 : vector<8x64xf32> to vector<8x64xbf16>
    %c0_5 = arith.constant 0 : index
    %c0_6 = arith.constant 0 : index
    %9 = vector.load %arg6[%c0_5, %c0_6] : memref<8x64xbf16, #tpu.memory_space<vmem>>, vector<8x64xbf16>
    tpu.vector_store %arg6[%c0_5, %c0_6], %8 {strides = array<i32>} : memref<8x64xbf16, #tpu.memory_space<vmem>>, vector<8x64xbf16>,
    %cst_7 = arith.constant 0.000000e+00 : f32
    %10 = vector.broadcast %cst_7 : f32 to vector<8x64xf32>
    %11 = arith.maximumf %7, %10 : vector<8x64xf32>
    %12 = arith.truncf %11 : vector<8x64xf32> to vector<8x64xbf16>
    %c0_8 = arith.constant 0 : index
    %c0_9 = arith.constant 0 : index
    %13 = vector.load %arg4[%c0_8, %c0_9] : memref<64x16xf32, #tpu.memory_space<vmem>>, vector<64x16xf32>
    %14 = arith.truncf %13 : vector<64x16xf32> to vector<64x16xbf16>
    %cst_10 = arith.constant dense<0.000000e+00> : vector<8x16xf32>
    %15 = tpu.matmul %12, %14, %cst_10 {dimension_numbers = #tpu.dot_dimension_numbers<[1], [0], [0], [1], [0, 0, 1, 1], [], []>} : vector<8x64xbf16>, vector<64x16xbf16>, vector<8x16xf32> -> vector<8x16xf32>
    %c0_11 = arith.constant 0 : index
    %c0_12 = arith.constant 0 : index
    %16 = vector.load %arg5[%c0_11, %c0_12] : memref<1x16xf32, #tpu.memory_space<vmem>>, vector<1x16xf32>
    %17 = vector.broadcast %16 : vector<1x16xf32> to vector<8x16xf32>
    %18 = arith.addf %15, %17 : vector<8x16xf32>
    %19 = arith.truncf %18 : vector<8x16xf32> to vector<8x16xbf16>
    %c0_13 = arith.constant 0 : index
    %c0_14 = arith.constant 0 : index
    %20 = vector.load %arg7[%c0_13, %c0_14] : memref<8x16xbf16, #tpu.memory_space<vmem>>, vector<8x16xbf16>
    tpu.vector_store %arg7[%c0_13, %c0_14], %19 {strides = array<i32>} : memref<8x16xbf16, #tpu.memory_space<vmem>>, vector<8x16xbf16>,
    return
  }
  func.func @transform_0(%arg0: i32) -> (i32, i32) {
    %c0_i32 = arith.constant 0 : i32
    %c0_i32_0 = arith.constant 0 : i32
    return %arg0, %c0_i32 : i32, i32
  }
  func.func @transform_1(%arg0: i32) -> (i32, i32) {
    %c0_i32 = arith.constant 0 : i32
    %c0_i32_0 = arith.constant 0 : i32
    %c0_i32_1 = arith.constant 0 : i32
    return %c0_i32, %c0_i32_0 : i32, i32
  }
  func.func @transform_2(%arg0: i32) -> (i32, i32) {
    %c0_i32 = arith.constant 0 : i32
    %c0_i32_0 = arith.constant 0 : i32
    %c0_i32_1 = arith.constant 0 : i32
    return %c0_i32, %c0_i32_0 : i32, i32
  }
  func.func @transform_3(%arg0: i32) -> (i32, i32) {
    %c0_i32 = arith.constant 0 : i32
    %c0_i32_0 = arith.constant 0 : i32
    %c0_i32_1 = arith.constant 0 : i32
    return %c0_i32, %c0_i32_0 : i32, i32
  }
  func.func @transform_4(%arg0: i32) -> (i32, i32) {
    %c0_i32 = arith.constant 0 : i32
    %c0_i32_0 = arith.constant 0 : i32
    %c0_i32_1 = arith.constant 0 : i32
    return %c0_i32, %c0_i32_0 : i32, i32
  }
  func.func @transform_5(%arg0: i32) -> (i32, i32) {
    %c0_i32 = arith.constant 0 : i32
    %c0_i32_0 = arith.constant 0 : i32
    return %arg0, %c0_i32 : i32, i32
  }
  func.func @transform_6(%arg0: i32) -> (i32, i32) {
    %c0_i32 = arith.constant 0 : i32
    %c0_i32_0 = arith.constant 0 : i32
    return %arg0, %c0_i32 : i32, i32
  }
}

</mosaic_0001>

<llo_original>
// kernel: feature_extractor_forward.1
$region0: #{feature_extractor_forward.1}
  #allocation0 [shape = 'u32[]', space=smem, size = 0x4, offset = 0x4, fixed_abs, tag = 'smem constant byte address 0x4 - core index']
  #allocation1 [shape = 'u32[144,128]{1,0:T(1,128)}', space=vmem, size = 0x12000, scoped, tag = 'internal scratch']
  %s0 = inlined_call_operand.vmem [shape: f32[8,32], index: 0, kind: input, shape index: {}]
  %s1 = inlined_call_operand.vmem [shape: f32[32,64], index: 1, kind: input, shape index: {}]
  %s2 = inlined_call_operand.vmem [shape: f32[1,64], index: 2, kind: input, shape index: {}]
  %s3 = inlined_call_operand.vmem [shape: f32[64,16], index: 3, kind: input, shape index: {}]
  %s4 = inlined_call_operand.vmem [shape: f32[1,16], index: 4, kind: input, shape index: {}]
  %s5 = inlined_call_operand.hbm [shape: bf16[8,64], index: 5, kind: output, shape index: {0}]
  %s6 = inlined_call_operand.hbm [shape: bf16[8,16], index: 6, kind: output, shape index: {1}]
  %7 = xla_tuple %s5, %s6
  %s8 = sld [smem:[#allocation0]]
  $region38: #{feature_extractor_forward.1} parent=0
    _
  %s10 = ssub.s32 1, %s8
  %s11 = scalar_select 0, %s10, %s8
  $region1: #{feature_extractor_forward.1} parent=0
    #allocation2 [shape = 'u8[2048]{0}', space=vmem, size = 0x800, scoped, tag = 'output window, operand 0, single buffered']
    #allocation3 [shape = 's32[1]{0}', space=sflag, size = 0x4, scoped, tag = 'scoped memory for feature_extractor_forward.1']
    #allocation4 [shape = 'u8[2048]{0}', space=vmem, size = 0x800, scoped, tag = 'output window, operand 1, single buffered']
    #allocation5 [shape = 's32[1]{0}', space=sflag, size = 0x4, scoped, tag = 'scoped memory for feature_extractor_forward.1']
    %12 = vsyncpa [#allocation3], 0
    %13 = vsyncpa [#allocation5], 0
    // Predicated region
    $region2: #{feature_extractor_forward.1} parent=1 // pred_check
      _
    $region3: #{feature_extractor_forward.1} parent=1 // pred_check_branch
      %15 = sbr.rel (0) target = $region5
    $region4: #{feature_extractor_forward.1} parent=1 // pred_region
      _
    $region5: #{feature_extractor_forward.1} parent=1 // pred_fallthru
      _
    // Predicated region
    $region6: #{feature_extractor_forward.1} parent=1 // pred_check
      _
    $region7: #{feature_extractor_forward.1} parent=1 // pred_check_branch
      %17 = sbr.rel (0) target = $region9
    $region8: #{feature_extractor_forward.1} parent=1 // pred_region
      _
    $region9: #{feature_extractor_forward.1} parent=1 // pred_fallthru
      _
    // Predicated region
    $region10: #{feature_extractor_forward.1} parent=1 // pred_check
      _
    $region11: #{feature_extractor_forward.1} parent=1 // pred_check_branch
      %19 = sbr.rel (0) target = $region13
    $region12: #{feature_extractor_forward.1} parent=1 // pred_region
      _
    $region13: #{feature_extractor_forward.1} parent=1 // pred_fallthru
      _
    // Predicated region
    $region14: #{feature_extractor_forward.1} parent=1 // pred_check
      _
    $region15: #{feature_extractor_forward.1} parent=1 // pred_check_branch
      %21 = sbr.rel (0) target = $region17
    $region16: #{feature_extractor_forward.1} parent=1 // pred_region
      _
    $region17: #{feature_extractor_forward.1} parent=1 // pred_fallthru
      _
    // Predicated region
    $region18: #{feature_extractor_forward.1} parent=1 // pred_check
      _
    $region19: #{feature_extractor_forward.1} parent=1 // pred_check_branch
      %23 = sbr.rel (0) target = $region21
    $region20: #{feature_extractor_forward.1} parent=1 // pred_region
      _
    $region21: #{feature_extractor_forward.1} parent=1 // pred_fallthru
      _
    %v25 = vld [vmem:[%s0] sm:$0xff]
    %v26 = vpack.c.bf16 %v25, %v25
    %v27 = vld [vmem:[%s1] sm:$0xff]
    %v28 = vld [vmem:[%s1 + $0x8] sm:$0xff]
    %v29 = vld [vmem:[%s1 + $0x10] sm:$0xff]
    %v30 = vld [vmem:[%s1 + $0x18] sm:$0xff]
    %v31 = vpack.c.bf16 %v28, %v27
    %v32 = vpack.c.bf16 %v30, %v29
    %v33 = vld [vmem:[%s2] sm:$0x1]
    %v35 = vlaneseq
    %v36 = vshrl.u32 %v35, 7
    %v37 = vsub.s32 0, %v36
    %v38 = vrot.slane %v33, %v37
    %vm40 = vcmask 261120
    %v42 = vsel %vm40, %v26, 0
    %44 = vmatprep.subr.bf16.mxu0 0
    %45 = vmatpush1.bf16.msra.mxu0 %v31
    %46 = vmatprep.subr.bf16.mxu0 0
    %47 = vmatpush1.bf16.msra.mxu0 %v32
    %48 = vmatprep.subr.bf16.mxu0 0
    %49 = vmatpush1.bf16.msra.mxu0 0
    %50 = vmatprep.subr.bf16.mxu0 0
    %51 = vmatpush1.bf16.msra.mxu0 0
    %52 = vmatprep.subr.bf16.mxu0 0
    %53 = vmatpush1.bf16.msra.mxu0 0
    %54 = vmatprep.subr.bf16.mxu0 0
    %55 = vmatpush1.bf16.msra.mxu0 0
    %56 = vmatprep.subr.bf16.mxu0 0
    %57 = vmatpush1.bf16.msra.mxu0 0
    %58 = vmatprep.subr.bf16.mxu0 0
    %59 = vmatpush1.bf16.msra.mxu0 0
    %60 = vmatprep.subr.bf16.mxu0 0
    %61 = vmatpush1.bf16.msra.mxu0 0
    %62 = vmatprep.subr.bf16.mxu0 0
    %63 = vmatpush1.bf16.msra.mxu0 0
    %64 = vmatprep.subr.bf16.mxu0 0
    %65 = vmatpush1.bf16.msra.mxu0 0
    %66 = vmatprep.subr.bf16.mxu0 0
    %67 = vmatpush1.bf16.msra.mxu0 0
    %68 = vmatprep.subr.bf16.mxu0 0
    %69 = vmatpush1.bf16.msra.mxu0 0
    %70 = vmatprep.subr.bf16.mxu0 0
    %71 = vmatpush1.bf16.msra.mxu0 0
    %72 = vmatprep.subr.bf16.mxu0 0
    %73 = vmatpush1.bf16.msra.mxu0 0
    %74 = vmatprep.subr.bf16.mxu0 0
    %75 = vmatpush1.bf16.msra.mxu0 0
    %76 = vmatprep.mubr.bf16.mxu0 0
    %77 = vmatmul.mubr.bf16.gmra.mrb[0].mxu0 %v42
    %v78 = vpop.f32.mrb[0].mxu0
    %v79 = vadd.f32 %v38, %v78
    %v80 = vpop.f32.mrb[0].mxu0
    %v81 = vpop.f32.mrb[0].mxu0
    %v82 = vpop.f32.mrb[0].mxu0
    %83 = vdwg.mxu0
    %v84 = vpack.c.bf16 %v79, %v79
    %vm85 = vcmask 519168
    %86 = vst.msk [vmem:[#allocation2] sm:$0xf] %vm85, %v84
    %v87 = vmax.f32 %v79, 0.0
    %v88 = vpack.c.bf16 %v87, %v87
    %v89 = vld [vmem:[%s3] sm:$0xff]
    %v90 = vld [vmem:[%s3 + $0x8] sm:$0xff]
    %v91 = vld [vmem:[%s3 + $0x10] sm:$0xff]
    %v92 = vld [vmem:[%s3 + $0x18] sm:$0xff]
    %v93 = vld [vmem:[%s3 + $0x20] sm:$0xff]
    %v94 = vld [vmem:[%s3 + $0x28] sm:$0xff]
    %v95 = vld [vmem:[%s3 + $0x30] sm:$0xff]
    %v96 = vld [vmem:[%s3 + $0x38] sm:$0xff]
    %v97 = vpack.c.bf16 %v90, %v89
    %v98 = vpack.c.bf16 %v92, %v91
    %v99 = vpack.c.bf16 %v94, %v93
    %v100 = vpack.c.bf16 %v96, %v95
    %v101 = vld [vmem:[%s4] sm:$0x1]
    %v103 = vlaneseq
    %v104 = vshrl.u32 %v103, 7
    %v105 = vsub.s32 0, %v104
    %v106 = vrot.slane %v101, %v105
    %vm108 = vcmask 523264
    %v110 = vsel %vm108, %v88, 0
    %112 = vmatprep.subr.bf16.mxu0 0
    %113 = vmatpush1.bf16.msra.mxu0 %v97
    %114 = vmatprep.subr.bf16.mxu0 0
    %115 = vmatpush1.bf16.msra.mxu0 %v98
    %116 = vmatprep.subr.bf16.mxu0 0
    %117 = vmatpush1.bf16.msra.mxu0 %v99
    %118 = vmatprep.subr.bf16.mxu0 0
    %119 = vmatpush1.bf16.msra.mxu0 %v100
    %120 = vmatprep.subr.bf16.mxu0 0
    %121 = vmatpush1.bf16.msra.mxu0 0
    %122 = vmatprep.subr.bf16.mxu0 0
    %123 = vmatpush1.bf16.msra.mxu0 0
    %124 = vmatprep.subr.bf16.mxu0 0
    %125 = vmatpush1.bf16.msra.mxu0 0
    %126 = vmatprep.subr.bf16.mxu0 0
    %127 = vmatpush1.bf16.msra.mxu0 0
    %128 = vmatprep.subr.bf16.mxu0 0
    %129 = vmatpush1.bf16.msra.mxu0 0
    %130 = vmatprep.subr.bf16.mxu0 0
    %131 = vmatpush1.bf16.msra.mxu0 0
    %132 = vmatprep.subr.bf16.mxu0 0
    %133 = vmatpush1.bf16.msra.mxu0 0
    %134 = vmatprep.subr.bf16.mxu0 0
    %135 = vmatpush1.bf16.msra.mxu0 0
    %136 = vmatprep.subr.bf16.mxu0 0
    %137 = vmatpush1.bf16.msra.mxu0 0
    %138 = vmatprep.subr.bf16.mxu0 0
    %139 = vmatpush1.bf16.msra.mxu0 0
    %140 = vmatprep.subr.bf16.mxu0 0
    %141 = vmatpush1.bf16.msra.mxu0 0
    %142 = vmatprep.subr.bf16.mxu0 0
    %143 = vmatpush1.bf16.msra.mxu0 0
    %144 = vmatprep.mubr.bf16.mxu0 0
    %145 = vmatmul.mubr.bf16.gmra.mrb[0].mxu0 %v110
    %v146 = vpop.f32.mrb[0].mxu0
    %v147 = vadd.f32 %v106, %v146
    %v148 = vpop.f32.mrb[0].mxu0
    %v149 = vpop.f32.mrb[0].mxu0
    %v150 = vpop.f32.mrb[0].mxu0
    %151 = vdwg.mxu0
    %v152 = vpack.c.bf16 %v147, %v147
    %vm153 = vcmask 125952
    %154 = vst.msk [vmem:[#allocation4] sm:$0xf] %vm153, %v152
    // Predicated region
    $region22: #{feature_extractor_forward.1} parent=1 // pred_check
      _
    $region23: #{feature_extractor_forward.1} parent=1 // pred_check_branch
      %156 = sbr.rel (0) target = $region25
    $region24: #{feature_extractor_forward.1} parent=1 // pred_region
      %s158 = ssub.s32 64, 64
      %159 = vsyncadd [#allocation3], %s158
      %s161 = sshll.u32 [#allocation2], 4
      %s162 = int_to_ptr.vmem [resolvable:$true] %s161
      %164 = dma.vmem_to_hbm [thread:$0]  %s162, 64, %s5, [#allocation3]
    $region25: #{feature_extractor_forward.1} parent=1 // pred_fallthru
      _
    // Predicated region
    $region26: #{feature_extractor_forward.1} parent=1 // pred_check
      _
    $region27: #{feature_extractor_forward.1} parent=1 // pred_check_branch
      %166 = sbr.rel (0) target = $region29
    $region28: #{feature_extractor_forward.1} parent=1 // pred_region
      %s168 = ssub.s32 64, 64
      %169 = vsyncadd [#allocation5], %s168
      %s171 = sshll.u32 [#allocation4], 4
      %s172 = int_to_ptr.vmem [resolvable:$true] %s171
      %174 = dma.vmem_to_hbm [thread:$0]  %s172, 64, %s6, [#allocation5]
    $region29: #{feature_extractor_forward.1} parent=1 // pred_fallthru
      _
    // Predicated region
    $region30: #{feature_extractor_forward.1} parent=1 // pred_check
      _
    $region31: #{feature_extractor_forward.1} parent=1 // pred_check_branch
      %176 = sbr.rel (0) target = $region33
    $region32: #{feature_extractor_forward.1} parent=1 // pred_region
      %177 = dma.done [#allocation3], 64
    $region33: #{feature_extractor_forward.1} parent=1 // pred_fallthru
      _
    // Predicated region
    $region34: #{feature_extractor_forward.1} parent=1 // pred_check
      _
    $region35: #{feature_extractor_forward.1} parent=1 // pred_check_branch
      %179 = sbr.rel (0) target = $region37
    $region36: #{feature_extractor_forward.1} parent=1 // pred_region
      %180 = dma.done [#allocation5], 64
    $region37: #{feature_extractor_forward.1} parent=1 // pred_fallthru
      _
    %181 = vsyncpa [#allocation3], 1
    %182 = vsyncpa [#allocation5], 1

</llo_original>
